<compile_context>
chip_gen: v6e
topology: v6e:2x2x1
jax: 0.10.0
libtpu: 0.0.40
codegen_flags: <defaults>
</compile_context>

<pallas_src>
import functools

import jax
import jax.numpy as jnp
from jax.experimental import pallas as pl
from jax.experimental.pallas import tpu as pltpu

ITER_N = 5  # matches SqrtmLayer(cov_mat, 5)


# --------------------------------------------------------------------------
# Phase 1: streamed accumulation of partial gram = X X^T and rowsum = X 1.
# --------------------------------------------------------------------------
def _soca_gram_kernel(x_ref, gram_ref, rsum_ref, *, use_bf16):
    t = pl.program_id(2)

    @pl.when(t == 0)
    def _init():
        gram_ref[...] = jnp.zeros_like(gram_ref)
        rsum_ref[...] = jnp.zeros_like(rsum_ref)

    xt = x_ref[0]                                              # (C, TM) f32
    xm = xt.astype(jnp.bfloat16) if use_bf16 else xt
    # gram += X X^T : contract the lane/spatial dim of both operands (MXU).
    gram_ref[...] += jax.lax.dot_general(
        xm, xm, (((1,), (1,)), ((), ())),
        preferred_element_type=jnp.float32)
    # Lane-axis sum rides the XLU; it has slack here (gram output is only CxC).
    # If it ever saturates, fold this into the matmul with a ones column.
    rsum_ref[...] += jnp.sum(xt, axis=1, keepdims=True)        # (C, 1)


# --------------------------------------------------------------------------
# Phase 1b: combine partials, Covpool normalize, Newton-Schulz sqrt,
# row mean and conv_du -> per-batch (C, 1) channel scale.
# --------------------------------------------------------------------------
def _soca_finalize_kernel(gram_ref, rsum_ref, w1_ref, b1_ref, w2_ref, b2_ref,
                          s_ref, *, m_total, n_split):
    gram = gram_ref[0]                                         # (C, C)
    rsum = rsum_ref[0]                                         # (C, 1)
    for p in range(1, n_split):                                # static unroll
        gram = gram + gram_ref[p]
        rsum = rsum + rsum_ref[p]

    inv_m = 1.0 / m_total
    # cov = X I_hat X^T = gram/M - (X 1)(X 1)^T / M^2
    outer = jax.lax.dot_general(rsum, rsum, (((1,), (1,)), ((), ())),
                                preferred_element_type=jnp.float32)
    cov = gram * inv_m - outer * (inv_m * inv_m)               # (C, C)

    C = cov.shape[0]
    eye = jnp.eye(C, dtype=jnp.float32)
    I3 = 3.0 * eye
    normA = jnp.maximum(jnp.sum(cov * eye), 1e-12)             # trace, eps-guarded
    A = cov * (1.0 / normA)

    # Newton-Schulz iteration, iterN = 5
    ZY = 0.5 * (I3 - A)
    Y = jnp.dot(A, ZY, preferred_element_type=jnp.float32)
    Z = ZY
    for _ in range(1, ITER_N - 1):
        ZY = 0.5 * (I3 - jnp.dot(Z, Y, preferred_element_type=jnp.float32))
        Y, Z = (jnp.dot(Y, ZY, preferred_element_type=jnp.float32),
                jnp.dot(ZY, Z, preferred_element_type=jnp.float32))
    ZY = 0.5 * jnp.dot(
        Y, I3 - jnp.dot(Z, Y, preferred_element_type=jnp.float32),
        preferred_element_type=jnp.float32)
    cov_sqrt = ZY * jnp.sqrt(normA)                            # (C, C)

    # torch.mean(cov_mat_sqrt, dim=1): cov_sqrt is symmetric, so a lane-axis
    # mean gives the same (C, 1) column without a transpose.
    d = jnp.mean(cov_sqrt, axis=-1, keepdims=True)             # (C, 1)

    # conv_du: 1x1 conv (C->C/r) + ReLU + 1x1 conv (C/r->C) + sigmoid
    h = jax.lax.dot_general(w1_ref[...], d, (((1,), (0,)), ((), ())),
                            preferred_element_type=jnp.float32) + b1_ref[...]
    h = jnp.maximum(h, 0.0)                                    # (Cr, 1)
    s = jax.lax.dot_general(w2_ref[...], h, (((1,), (0,)), ((), ())),
                            preferred_element_type=jnp.float32) + b2_ref[...]
    s_ref[...] = jax.nn.sigmoid(s)                             # (C, 1)


# --------------------------------------------------------------------------
# Phase 2: lane-dense streamed rescale  out = x * scale  (in place over x).
# --------------------------------------------------------------------------
def _soca_scale_kernel(s_ref, x_ref, o_ref):
    o_ref[0] = x_ref[0] * s_ref[0]        # (C, TM) * (C, 1) broadcast on lanes


# --------------------------------------------------------------------------
# Wrapper helpers
# --------------------------------------------------------------------------
def _hw_budgets():
    """Generation-aware (streamed-tile bytes, vmem_limit cap)."""
    vmem_phys = 128 << 20
    try:
        vmem_phys = int(pltpu.get_tpu_info().vmem_capacity_bytes)
    except Exception:
        pass
    if vmem_phys <= (64 << 20):        # v7x-class: 64 MiB physical VMEM
        return 4 << 20, 40 << 20
    return 8 << 20, 64 << 20           # v5e / v6e: 128 MiB physical VMEM


def _choose_tile(m, c, target_bytes, itemsize=4):
    """Lane-aligned (multiple-of-128) tile width; never a full-extent block."""
    cap = max(128, (target_bytes // (c * itemsize)) // 128 * 128)
    m_aligned = int(pl.cdiv(m, 128)) * 128
    return int(min(cap, m_aligned))


def _params(semantics, need_bytes, cap):
    return pltpu.CompilerParams(
        dimension_semantics=semantics,
        vmem_limit_bytes=int(min(cap, max(16 << 20, need_bytes))))


# --------------------------------------------------------------------------
# Forward wrapper
# --------------------------------------------------------------------------
def soca_forward(x, w1, b1, w2, b2, *, use_bf16_gram=None):
    """x: (bs, C, H, W) NCHW. w1:(Cr,C), b1:(1,Cr), w2:(C,Cr), b2:(1,C)."""
    bs, C, H, W = x.shape
    Cr = w1.shape[0]
    H_MAX = W_MAX = 1000

    if use_bf16_gram is None:
        # bf16 gram operands only pay off once the stats pass is MXU-bound
        # (C >= ~128); below that it is HBM-bound and f32 keeps tolerances tight.
        use_bf16_gram = C >= 128

    tile_target, vmem_cap = _hw_budgets()

    # Crop logic from the PyTorch forward (static shapes -> plain Python).
    # Uses <= so H == 1000 / W == 1000 stays on the no-crop path instead of the
    # original's negative-offset edge case.
    if H <= H_MAX and W <= W_MAX:
        crop = None
    elif H <= H_MAX:                                   # W > W_MAX
        crop = (0, H, (W - W_MAX) // 2, W_MAX)
    elif W <= W_MAX:                                   # H > H_MAX
        crop = ((H - H_MAX) // 2, H_MAX, 0, W)
    else:
        crop = ((H - H_MAX) // 2, H_MAX, (W - W_MAX) // 2, W_MAX)

    M = H * W
    # Native (bs, C, M) layout: channels on sublanes, spatial on lanes (free).
    x_cm = x.reshape(bs, C, M).astype(jnp.float32)

    if crop is None:
        xsub_cm, Ms = x_cm, M
    else:
        # TODO(synk): express the crop through the phase-1 BlockSpec index_map
        # (contiguous for the H-only crop) to avoid this materialized copy.
        Ho, Hs, Wo, Ws = crop
        Ms = Hs * Ws
        xsub_cm = x[:, :, Ho:Ho + Hs, Wo:Wo + Ws].reshape(
            bs, C, Ms).astype(jnp.float32)

    w1f = jnp.asarray(w1, jnp.float32)
    w2f = jnp.asarray(w2, jnp.float32)
    b1c = jnp.asarray(b1, jnp.float32).reshape(Cr, 1)
    b2c = jnp.asarray(b2, jnp.float32).reshape(C, 1)

    # ---- Phase 1: streamed partial gram / rowsum ---------------------------
    tile1 = _choose_tile(Ms, C, tile_target)
    nt = int(pl.cdiv(Ms, tile1))
    n_split = 2 if nt >= 2 else 1          # splits spatial tiles across v7x TCs
    nt_per = int(pl.cdiv(nt, n_split))
    Ms_pad = n_split * nt_per * tile1
    if Ms_pad != Ms:
        # Zero padding is exactly neutral for gram and rowsum.
        xsub_cm = jnp.pad(xsub_cm, ((0, 0), (0, 0), (0, Ms_pad - Ms)))

    gram, rsum = pl.pallas_call(
        functools.partial(_soca_gram_kernel, use_bf16=use_bf16_gram),
        out_shape=(jax.ShapeDtypeStruct((bs, n_split, C, C), jnp.float32),
                   jax.ShapeDtypeStruct((bs, n_split, C, 1), jnp.float32)),
        grid_spec=pltpu.PrefetchScalarGridSpec(
            num_scalar_prefetch=0,
            grid=(n_split, bs, nt_per),
            in_specs=[
                pl.BlockSpec((1, C, tile1),
                             lambda s, b, t: (b, 0, s * nt_per + t)),
            ],
            out_specs=[
                pl.BlockSpec((None, None, C, C), lambda s, b, t: (b, s, 0, 0)),
                pl.BlockSpec((None, None, C, 1), lambda s, b, t: (b, s, 0, 0)),
            ],
        ),
        compiler_params=_params(
            ("parallel", "parallel", "arbitrary"),
            3 * C * tile1 * 4 + 8 * C * (C + 1) * 4 + (4 << 20), vmem_cap),
    )(xsub_cm)

    # ---- Phase 1b: combine + Newton-Schulz + conv_du -> (bs, C, 1) scale ----
    scale = pl.pallas_call(
        functools.partial(_soca_finalize_kernel, m_total=Ms, n_split=n_split),
        out_shape=jax.ShapeDtypeStruct((bs, C, 1), jnp.float32),
        grid_spec=pltpu.PrefetchScalarGridSpec(
            num_scalar_prefetch=0,
            grid=(bs,),
            in_specs=[
                pl.BlockSpec((None, n_split, C, C), lambda b: (b, 0, 0, 0)),
                pl.BlockSpec((None, n_split, C, 1), lambda b: (b, 0, 0, 0)),
                pl.BlockSpec((Cr, C), lambda b: (0, 0)),
                pl.BlockSpec((Cr, 1), lambda b: (0, 0)),
                pl.BlockSpec((C, Cr), lambda b: (0, 0)),
                pl.BlockSpec((C, 1), lambda b: (0, 0)),
            ],
            out_specs=pl.BlockSpec((None, C, 1), lambda b: (b, 0, 0)),
        ),
        compiler_params=_params(
            ("parallel",),
            (4 * n_split + 24) * C * C * 4 + (4 << 20), vmem_cap),
    )(gram, rsum, w1f, b1c, w2f, b2c)

    # ---- Phase 2: streamed rescale of the full input (in place over x) -----
    if crop is None:
        x2, M_pad, tile2 = xsub_cm, Ms_pad, tile1
    else:
        tile2 = _choose_tile(M, C, tile_target)
        M_pad = int(pl.cdiv(M, tile2)) * tile2
        x2 = x_cm if M_pad == M else jnp.pad(
            x_cm, ((0, 0), (0, 0), (0, M_pad - M)))
    nt2 = M_pad // tile2

    out_cm = pl.pallas_call(
        _soca_scale_kernel,
        out_shape=jax.ShapeDtypeStruct((bs, C, M_pad), jnp.float32),
        grid_spec=pltpu.PrefetchScalarGridSpec(
            num_scalar_prefetch=0,
            grid=(bs, nt2),
            in_specs=[
                pl.BlockSpec((1, C, 1), lambda b, t: (b, 0, 0)),
                pl.BlockSpec((1, C, tile2), lambda b, t: (b, 0, t)),
            ],
            out_specs=pl.BlockSpec((1, C, tile2), lambda b, t: (b, 0, t)),
        ),
        input_output_aliases={1: 0},      # rescale writes in place over x
        compiler_params=_params(
            ("parallel", "parallel"),
            4 * C * tile2 * 4 + (4 << 20), vmem_cap),
    )(scale, x2)

    if M_pad != M:
        out_cm = out_cm[:, :, :M]
    return out_cm.reshape(bs, C, H, W)


# --------------------------------------------------------------------------
# Pure-JAX mirror of the PyTorch forward, for verification.
# --------------------------------------------------------------------------
def soca_reference(x, w1, b1, w2, b2, iterN=ITER_N):
    bs, C, H, W = x.shape
    M = H * W
    xf = x.reshape(bs, C, M).astype(jnp.float32)
    I_hat = (-1.0 / M / M) * jnp.ones((M, M), jnp.float32) \
        + (1.0 / M) * jnp.eye(M, dtype=jnp.float32)
    cov = jnp.einsum('bcm,mn,bdn->bcd', xf, I_hat, xf)
    eye = jnp.eye(C, dtype=jnp.float32)
    I3 = 3.0 * eye
    normA = jnp.trace(cov, axis1=1, axis2=2)
    A = cov / normA[:, None, None]
    ZY = 0.5 * (I3 - A)
    Y = A @ ZY
    Z = ZY
    for _ in range(1, iterN - 1):
        ZY = 0.5 * (I3 - Z @ Y)
        Y, Z = Y @ ZY, ZY @ Z
    ZY = 0.5 * (Y @ (I3 - Z @ Y))
    ysqrt = ZY * jnp.sqrt(normA)[:, None, None]
    d = jnp.mean(ysqrt, axis=1)                         # (bs, C)
    hid = jnp.maximum(d @ w1.T + b1, 0.0)
    s = jax.nn.sigmoid(hid @ w2.T + b2)                 # (bs, C)
    return x * s[:, :, None, None]


if __name__ == "__main__":
    bs, C, H, W = 2, 4, 16, 16
    reduction = 2
    Cr = C // reduction

    key = jax.random.PRNGKey(0)
    kx, k1, k2, k3, k4 = jax.random.split(key, 5)
    x = jax.random.normal(kx, (bs, C, H, W), dtype=jnp.float32)
    # deterministic parameter init (conv 1x1 weights flattened to FC matrices)
    w1 = jax.random.normal(k1, (Cr, C), dtype=jnp.float32) * 0.2   # conv1 weight (Cr,C,1,1)
    b1 = jax.random.normal(k2, (1, Cr), dtype=jnp.float32) * 0.05  # conv1 bias
    w2 = jax.random.normal(k3, (C, Cr), dtype=jnp.float32) * 0.2   # conv2 weight (C,Cr,1,1)
    b2 = jax.random.normal(k4, (1, C), dtype=jnp.float32) * 0.05   # conv2 bias

    out = soca_forward(x, w1, b1, w2, b2)
    out = jax.block_until_ready(out)

    ref = soca_reference(x, w1, b1, w2, b2)
    assert out.shape == x.shape
    max_err = float(jnp.max(jnp.abs(out - ref)))
    assert jnp.allclose(out, ref, rtol=1e-3, atol=1e-4), f"max abs err {max_err}"
    print("KERNEL_OK")
</pallas_src>

<mosaic_0001>
module attributes {stable_mosaic.version = 11 : i64} {
  func.func @_soca_gram_kernel(%arg0: i32, %arg1: i32, %arg2: i32, %arg3: memref<1x4x256xf32, #tpu.memory_space<vmem>>, %arg4: memref<1x1x4x4xf32, #tpu.memory_space<vmem>>, %arg5: memref<1x1x4x1xf32, #tpu.memory_space<vmem>>) attributes {dimension_semantics = [#tpu.dimension_semantics<parallel>, #tpu.dimension_semantics<parallel>, #tpu.dimension_semantics<arbitrary>], iteration_bounds = array<i64: 1, 2, 1>, scalar_prefetch = 0 : i64, scratch_operands = 0 : i64, tpu.core_type = #tpu.core_type<tc>, window_params = [{transform_indices = @transform_0, window_bounds = array<i64: 1, 4, 256>}, {transform_indices = @transform_1, window_bounds = array<i64: 1, 1, 4, 4>}, {transform_indices = @transform_2, window_bounds = array<i64: 1, 1, 4, 1>}]} {
    %c0_i32 = arith.constant 0 : i32
    %0 = arith.cmpi eq, %arg2, %c0_i32 : i32
    %1 = arith.extui %0 : i1 to i32
    %c0_i32_0 = arith.constant 0 : i32
    %2 = arith.cmpi ne, %1, %c0_i32_0 : i32
    scf.if %2 {
      %cst_20 = arith.constant 0.000000e+00 : f32
      %20 = vector.broadcast %cst_20 : f32 to vector<4x4xf32>
      %c0_21 = arith.constant 0 : index
      %c0_22 = arith.constant 0 : index
      %c0_23 = arith.constant 0 : index
      %c0_24 = arith.constant 0 : index
      %21 = vector.load %arg4[%c0_21, %c0_22, %c0_23, %c0_24] : memref<1x1x4x4xf32, #tpu.memory_space<vmem>>, vector<1x1x4x4xf32>
      %22 = vector.shape_cast %21 : vector<1x1x4x4xf32> to vector<4x4xf32>
      %23 = vector.shape_cast %20 : vector<4x4xf32> to vector<1x1x4x4xf32>
      tpu.vector_store %arg4[%c0_21, %c0_22, %c0_23, %c0_24], %23 {strides = array<i32>} : memref<1x1x4x4xf32, #tpu.memory_space<vmem>>, vector<1x1x4x4xf32>,
      %cst_25 = arith.constant 0.000000e+00 : f32
      %24 = vector.broadcast %cst_25 : f32 to vector<4x1xf32>
      %c0_26 = arith.constant 0 : index
      %c0_27 = arith.constant 0 : index
      %c0_28 = arith.constant 0 : index
      %c0_29 = arith.constant 0 : index
      %25 = vector.load %arg5[%c0_26, %c0_27, %c0_28, %c0_29] : memref<1x1x4x1xf32, #tpu.memory_space<vmem>>, vector<1x1x4x1xf32>
      %26 = vector.shape_cast %25 : vector<1x1x4x1xf32> to vector<4x1xf32>
      %27 = vector.shape_cast %24 : vector<4x1xf32> to vector<1x1x4x1xf32>
      tpu.vector_store %arg5[%c0_26, %c0_27, %c0_28, %c0_29], %27 {strides = array<i32>} : memref<1x1x4x1xf32, #tpu.memory_space<vmem>>, vector<1x1x4x1xf32>,
    } else {
    }
    %c0 = arith.constant 0 : index
    %c0_1 = arith.constant 0 : index
    %c0_2 = arith.constant 0 : index
    %3 = vector.load %arg3[%c0, %c0_1, %c0_2] : memref<1x4x256xf32, #tpu.memory_space<vmem>>, vector<1x4x256xf32>
    %4 = vector.shape_cast %3 : vector<1x4x256xf32> to vector<4x256xf32>
    %c0_3 = arith.constant 0 : index
    %c0_4 = arith.constant 0 : index
    %c0_5 = arith.constant 0 : index
    %c0_6 = arith.constant 0 : index
    %5 = vector.load %arg4[%c0_3, %c0_4, %c0_5, %c0_6] : memref<1x1x4x4xf32, #tpu.memory_space<vmem>>, vector<1x1x4x4xf32>
    %6 = vector.shape_cast %5 : vector<1x1x4x4xf32> to vector<4x4xf32>
    %cst = arith.constant dense<0.000000e+00> : vector<4x4xf32>
    %7 = tpu.matmul %4, %4, %cst {dimension_numbers = #tpu.dot_dimension_numbers<[1], [1], [0], [0], [0, 0, 1, 0], [], []>} : vector<4x256xf32>, vector<4x256xf32>, vector<4x4xf32> -> vector<4x4xf32>
    %8 = arith.addf %6, %7 : vector<4x4xf32>
    %c0_7 = arith.constant 0 : index
    %c0_8 = arith.constant 0 : index
    %c0_9 = arith.constant 0 : index
    %c0_10 = arith.constant 0 : index
    %9 = vector.load %arg4[%c0_7, %c0_8, %c0_9, %c0_10] : memref<1x1x4x4xf32, #tpu.memory_space<vmem>>, vector<1x1x4x4xf32>
    %10 = vector.shape_cast %9 : vector<1x1x4x4xf32> to vector<4x4xf32>
    %11 = vector.shape_cast %8 : vector<4x4xf32> to vector<1x1x4x4xf32>
    tpu.vector_store %arg4[%c0_7, %c0_8, %c0_9, %c0_10], %11 {strides = array<i32>} : memref<1x1x4x4xf32, #tpu.memory_space<vmem>>, vector<1x1x4x4xf32>,
    %c0_11 = arith.constant 0 : index
    %c0_12 = arith.constant 0 : index
    %c0_13 = arith.constant 0 : index
    %c0_14 = arith.constant 0 : index
    %12 = vector.load %arg5[%c0_11, %c0_12, %c0_13, %c0_14] : memref<1x1x4x1xf32, #tpu.memory_space<vmem>>, vector<1x1x4x1xf32>
    %13 = vector.shape_cast %12 : vector<1x1x4x1xf32> to vector<4x1xf32>
    %cst_15 = arith.constant dense<0.000000e+00> : vector<4xf32>
    %14 = vector.multi_reduction <add>, %4, %cst_15 [1] : vector<4x256xf32> to vector<4xf32>
    %15 = vector.shape_cast %14 : vector<4xf32> to vector<4x1xf32>
    %16 = arith.addf %13, %15 : vector<4x1xf32>
    %c0_16 = arith.constant 0 : index
    %c0_17 = arith.constant 0 : index
    %c0_18 = arith.constant 0 : index
    %c0_19 = arith.constant 0 : index
    %17 = vector.load %arg5[%c0_16, %c0_17, %c0_18, %c0_19] : memref<1x1x4x1xf32, #tpu.memory_space<vmem>>, vector<1x1x4x1xf32>
    %18 = vector.shape_cast %17 : vector<1x1x4x1xf32> to vector<4x1xf32>
    %19 = vector.shape_cast %16 : vector<4x1xf32> to vector<1x1x4x1xf32>
    tpu.vector_store %arg5[%c0_16, %c0_17, %c0_18, %c0_19], %19 {strides = array<i32>} : memref<1x1x4x1xf32, #tpu.memory_space<vmem>>, vector<1x1x4x1xf32>,
    return
  }
  func.func @transform_0(%arg0: i32, %arg1: i32, %arg2: i32) -> (i32, i32, i32) {
    %c1_i32 = arith.constant 1 : i32
    %0 = arith.muli %arg0, %c1_i32 : i32
    %1 = arith.addi %0, %arg2 : i32
    %c0_i32 = arith.constant 0 : i32
    %c0_i32_0 = arith.constant 0 : i32
    return %arg1, %c0_i32, %1 : i32, i32, i32
  }
  func.func @transform_1(%arg0: i32, %arg1: i32, %arg2: i32) -> (i32, i32, i32, i32) {
    %c0_i32 = arith.constant 0 : i32
    %c0_i32_0 = arith.constant 0 : i32
    %c0_i32_1 = arith.constant 0 : i32
    return %arg1, %arg0, %c0_i32, %c0_i32_0 : i32, i32, i32, i32
  }
  func.func @transform_2(%arg0: i32, %arg1: i32, %arg2: i32) -> (i32, i32, i32, i32) {
    %c0_i32 = arith.constant 0 : i32
    %c0_i32_0 = arith.constant 0 : i32
    %c0_i32_1 = arith.constant 0 : i32
    return %arg1, %arg0, %c0_i32, %c0_i32_0 : i32, i32, i32, i32
  }
}

</mosaic_0001>

<llo_original>
// kernel: tpu_custom_call.1
$region0: #{tpu_custom_call.1}
  #allocation0 [shape = 'u32[]', space=smem, size = 0x4, offset = 0x4, fixed_abs, tag = 'smem constant byte address 0x4 - core index']
  #allocation1 [shape = 'u32[144,128]{1,0:T(1,128)}', space=vmem, size = 0x12000, scoped, tag = 'internal scratch']
  %s0 = inlined_call_operand.hbm [shape: f32[2,4,256], index: 0, kind: input, shape index: {}]
  %s1 = inlined_call_operand.hbm [shape: f32[2,1,4,4], index: 1, kind: output, shape index: {0}]
  %s2 = inlined_call_operand.vmem [shape: f32[2,1,4,1], index: 2, kind: output, shape index: {1}]
  %3 = xla_tuple %s1, %s2
  %s4 = sld [smem:[#allocation0]]
  $region53: #{tpu_custom_call.1} parent=0
    _
  %s6 = ssub.s32 1, %s4
  %s7 = scalar_select 0, %s6, %s4
  $region1: #{tpu_custom_call.1} parent=0
    #allocation2 [shape = 'u8[8192]{0}', space=vmem, size = 0x2000, scoped, tag = 'input window, operand 0']
    #allocation3 [shape = 's32[2]{0}', space=sflag, size = 0x8, scoped, tag = 'scoped memory for tpu_custom_call.1']
    #allocation4 [shape = 's32[2]{0}', space=sflag, size = 0x8, scoped, tag = 'scoped memory for tpu_custom_call.1']
    #allocation5 [shape = 'u8[4096]{0}', space=vmem, size = 0x1000, scoped, tag = 'output window, operand 0']
    %8 = vsyncpa [#allocation3], 0
    %s9 = scalar_lea.sflag [#allocation3], 1
    %10 = vsyncpa %s9, 0
    %11 = vsyncpa [#allocation4], 0
    %s12 = scalar_lea.sflag [#allocation4], 1
    %13 = vsyncpa %s12, 0
    loop: start=0, step=1, limit=4
    $region2: #{tpu_custom_call.1} parent=1 // loop_pre_header
      _
    $region3: #{tpu_custom_call.1} parent=1 // loop_header
      %s15 = sphi 0, %s19
      %p16 = scmp.ge.s32.totalorder %s15, 4
      %s22 = sphi 0, %s41
      %s23 = sphi 0, %s37
      %s24 = sphi 0, %s33
      %s25 = sphi 0, %s22
      %s26 = sphi 0, %s23
      %s27 = sphi 0, %s24
      %s28 = sphi 0, %s25
      %s29 = sphi 0, %s26
      %s30 = sphi 0, %s27
      %s48 = sphi 0, %s50
      %s51 = sphi 0, %s48
      %s52 = sphi 0, %s51
      %s68 = sphi 0, %s52
      %s76 = sphi 0, %s78
      %s79 = sphi 0, %s76
      %s80 = sphi 0, %s79
      %s96 = sphi 0, %s80
      %s104 = sphi 0, %s106
      %s107 = sphi 0, %s104
      %s108 = sphi 0, %s107
      %s124 = sphi 0, %s108
    $region4: #{tpu_custom_call.1} parent=1 // loop_header_branch
      %18 = sbr.rel (%p16) target = $region8
    $region5: #{tpu_custom_call.1} parent=1 // loop_body
      %s20 = ssub.s32 %s15, 1
      %s21 = ssub.s32 %s15, 2
      %s31 = sadd.s32 1, %s24
      %p32 = scmp.ge.s32.totalorder %s31, 1
      %s33 = scalar_select %p32, 0, %s31
      %s34 = sadd.s32 1, %s23
      %s35 = scalar_select %p32, %s34, %s23
      %p36 = scmp.ge.s32.totalorder %s35, 2
      %s37 = scalar_select %p36, 0, %s35
      %s38 = sadd.s32 1, %s22
      %s39 = scalar_select %p36, %s38, %s22
      %p40 = scmp.ge.s32.totalorder %s39, 1
      %s41 = scalar_select %p40, 0, %s39
      %s42 = sadd.s32 %s22, %s24
      %s43 = sadd.s32 %s41, %s33
      %s44 = ssub.s32 %s23, %s37
      %s45 = ssub.s32 %s42, %s43
      %s46 = sor.u32 %s44, %s45
      %p47 = scmp.eq.s32.totalorder %s46, 0
      %s49 = sadd.s32 %s48, 1
      %s50 = scalar_select %p47, %s48, %s49
      %p53 = pneg %p47
      %p54 = scmp.eq.s32.totalorder %s15, 1
      %p55 = por %p53, %p54
      %p56 = scmp.ne.s32.totalorder %s48, %s51
      %p57 = scmp.eq.s32.totalorder %s15, 0
      %p58 = por %p56, %p57
      %p59 = scmp.ne.s32.totalorder %s48, %s51
      %p60 = scmp.eq.s32.totalorder %s20, 1
      %p61 = por %p59, %p60
      %p62 = scmp.ne.s32.totalorder %s51, %s52
      %p63 = scmp.eq.s32.totalorder %s20, 0
      %p64 = por %p62, %p63
      %p65 = scmp.ne.s32.totalorder %s51, %s52
      %p66 = scmp.eq.s32.totalorder %s21, 1
      %p67 = por %p65, %p66
      %p69 = scmp.ne.s32.totalorder %s52, %s68
      %p70 = scmp.eq.s32.totalorder %s21, 0
      %p71 = por %p69, %p70
      %s72 = ssub.s32 %s23, %s37
      %s73 = ssub.s32 %s22, %s41
      %s74 = sor.u32 %s72, %s73
      %p75 = scmp.eq.s32.totalorder %s74, 0
      %s77 = sadd.s32 %s76, 1
      %s78 = scalar_select %p75, %s76, %s77
      %p81 = pneg %p75
      %p82 = scmp.eq.s32.totalorder %s15, 1
      %p83 = por %p81, %p82
      %p84 = scmp.ne.s32.totalorder %s76, %s79
      %p85 = scmp.eq.s32.totalorder %s15, 0
      %p86 = por %p84, %p85
      %p87 = scmp.ne.s32.totalorder %s76, %s79
      %p88 = scmp.eq.s32.totalorder %s20, 1
      %p89 = por %p87, %p88
      %p90 = scmp.ne.s32.totalorder %s79, %s80
      %p91 = scmp.eq.s32.totalorder %s20, 0
      %p92 = por %p90, %p91
      %p93 = scmp.ne.s32.totalorder %s79, %s80
      %p94 = scmp.eq.s32.totalorder %s21, 1
      %p95 = por %p93, %p94
      %p97 = scmp.ne.s32.totalorder %s80, %s96
      %p98 = scmp.eq.s32.totalorder %s21, 0
      %p99 = por %p97, %p98
      %s100 = ssub.s32 %s23, %s37
      %s101 = ssub.s32 %s22, %s41
      %s102 = sor.u32 %s100, %s101
      %p103 = scmp.eq.s32.totalorder %s102, 0
      %s105 = sadd.s32 %s104, 1
      %s106 = scalar_select %p103, %s104, %s105
      %p109 = pneg %p103
      %p110 = scmp.eq.s32.totalorder %s15, 1
      %p111 = por %p109, %p110
      %p112 = scmp.ne.s32.totalorder %s104, %s107
      %p113 = scmp.eq.s32.totalorder %s15, 0
      %p114 = por %p112, %p113
      %p115 = scmp.ne.s32.totalorder %s104, %s107
      %p116 = scmp.eq.s32.totalorder %s20, 1
      %p117 = por %p115, %p116
      %p118 = scmp.ne.s32.totalorder %s107, %s108
      %p119 = scmp.eq.s32.totalorder %s20, 0
      %p120 = por %p118, %p119
      %p121 = scmp.ne.s32.totalorder %s107, %s108
      %p122 = scmp.eq.s32.totalorder %s21, 1
      %p123 = por %p121, %p122
      %p125 = scmp.ne.s32.totalorder %s108, %s124
      %p126 = scmp.eq.s32.totalorder %s21, 0
      %p127 = por %p125, %p126
      %p128 = scmp.le.s32.totalorder 1, %s15
      %p129 = scmp.lt.s32.totalorder %s15, 3
      %p130 = pnand %p128, %p129
      %p131 = pneg %p130
      // Predicated region
      $region9: #{tpu_custom_call.1} parent=5 // pred_check
        _
      $region10: #{tpu_custom_call.1} parent=5 // pred_check_branch
        %133 = sbr.rel (%p130) target = $region12
      $region11: #{tpu_custom_call.1} parent=5 // pred_region
        %s134 = ssub.s32 %s15, 1
      $region12: #{tpu_custom_call.1} parent=5 // pred_fallthru
        _
      %p135 = scmp.lt.s32.totalorder %s15, 2
      // Predicated region
      $region13: #{tpu_custom_call.1} parent=5 // pred_check
        %p136 = pneg %p135
      $region14: #{tpu_custom_call.1} parent=5 // pred_check_branch
        %138 = sbr.rel (%p136) target = $region16
      $region15: #{tpu_custom_call.1} parent=5 // pred_region
        // Predicated region
        $region17: #{tpu_custom_call.1} parent=15 // pred_check
          %p139 = pneg %p58
        $region18: #{tpu_custom_call.1} parent=15 // pred_check_branch
          %141 = sbr.rel (%p139) target = $region20
        $region19: #{tpu_custom_call.1} parent=15 // pred_region
          %s142 = sand.u32 %s48, 1
          %s143 = scalar_lea.sflag [#allocation3], %s142
          %s144 = sand.u32 %s48, 1
          %s145 = smul.addr %s144, 8
          %s146 = scalar_lea.vmem [#allocation2], %s145
          %s147 = sadd.s32 %s22, %s24
          %s148 = smul.u32 2, %s147
          %s150 = ssub.s32 128, 128
          %151 = vsyncadd %s143, %s150
          %s152 = smul.addr %s23, 2
          %s153 = sadd.s32 %s148, %s152
          %s154 = smul.addr %s153, 64
          %s155 = scalar_lea.hbm %s0, %s154
          %s157 = sshll.u32 %s146, 4
          %s158 = int_to_ptr.vmem [resolvable:$true] %s157
          %160 = dma.hbm_to_vmem [thread:$0]  %s155, 128, %s158, %s143
        $region20: #{tpu_custom_call.1} parent=15 // pred_fallthru
          _
      $region16: #{tpu_custom_call.1} parent=5 // pred_fallthru
        _
      %p161 = scmp.le.s32.totalorder 1, %s15
      %p162 = scmp.lt.s32.totalorder %s15, 3
      %p163 = pnand %p161, %p162
      %p164 = pneg %p163
      // Predicated region
      $region21: #{tpu_custom_call.1} parent=5 // pred_check
        _
      $region22: #{tpu_custom_call.1} parent=5 // pred_check_branch
        %166 = sbr.rel (%p163) target = $region24
      $region23: #{tpu_custom_call.1} parent=5 // pred_region
        %s167 = ssub.s32 %s15, 1
        %s168 = sand.u32 %s51, 1
        %s169 = scalar_lea.sflag [#allocation3], %s168
        %s170 = sand.u32 %s51, 1
        %s171 = smul.addr %s170, 8
        %s172 = scalar_lea.vmem [#allocation2], %s171
        // Predicated region
        $region25: #{tpu_custom_call.1} parent=23 // pred_check
          %p173 = pneg %p64
        $region26: #{tpu_custom_call.1} parent=23 // pred_check_branch
          %175 = sbr.rel (%p173) target = $region28
        $region27: #{tpu_custom_call.1} parent=23 // pred_region
          %176 = dma.done %s169, 128
        $region28: #{tpu_custom_call.1} parent=23 // pred_fallthru
          _
        %s177 = sand.u32 %s51, 1
        %s178 = scalar_lea.sflag [#allocation3], %s177
        %s179 = sand.u32 %s51, 1
        %s180 = smul.addr %s179, 8
        %s181 = scalar_lea.vmem [#allocation2], %s180
        %p182 = pneg %p64
        %p183 = pneg %p61
        %p184 = pneg %p92
        %p185 = pneg %p89
        %s186 = sand.u32 %s79, 1
        %s187 = scalar_lea.sflag [#allocation4], %s186
        %s188 = sand.u32 %s79, 1
        %s189 = smul.addr %s188, 4
        %s190 = scalar_lea.vmem [#allocation5], %s189
        %p191 = pneg %p120
        %p192 = pneg %p117
        %p193 = scmp.lt.s32.totalorder %s26, 1
        %s194 = scalar_select %p193, %s26, 1
        %p195 = scmp.lt.s32.totalorder %s25, 0
        %s196 = scalar_select %p195, %s25, 0
        %s197 = sadd.s32 %s196, %s194
        %s198 = smul.addr %s197, 4
        %s199 = scalar_lea.vmem %s2, %s198
        %s200 = sadd.s32 %s25, %s27
        %s201 = smul.u32 2, %s200
        %p202 = scmp.lt.s32.totalorder %s26, 1
        %s203 = scalar_select %p202, %s26, 1
        %p204 = scmp.lt.s32.totalorder %s25, 0
        %s205 = scalar_select %p204, %s25, 0
        %s206 = sadd.s32 %s205, %s203
        %s207 = smul.addr %s206, 4
        %s208 = scalar_lea.vmem %s2, %s207
        %p209 = scmp.eq.s32.totalorder %s27, 0
        // Predicated region
        $region29: #{tpu_custom_call.1} parent=23 // pred_check
          %p210 = pneg %p209
        $region30: #{tpu_custom_call.1} parent=23 // pred_check_branch
          %212 = sbr.rel (%p210) target = $region32
        $region31: #{tpu_custom_call.1} parent=23 // pred_region
          %vm213 = vcmask 27648
          %214 = vst.msk [vmem:[%s190] sm:$0xf] %vm213, 0.0
          %vm215 = vcmask 3072
          %216 = vst.msk [vmem:[%s208] sm:$0xf] %vm215, 0.0
        $region32: #{tpu_custom_call.1} parent=23 // pred_fallthru
          _
        %v217 = vld [vmem:[%s172] sm:$0xff]
        %v218 = vld [vmem:[%s190] sm:$0xf]
        %v220 = vcombine.high %v217, %v217
        %222 = vmatprep.subr.mxu0 0.0
        %223 = vmatpush1.xpose.msra.mxu0 0.0
        %224 = vmatprep.subr.mxu0 0.0
        %225 = vmatpush1.xpose.msra.mxu0 0.0
        %226 = vmatprep.subr.mxu0 0.0
        %227 = vmatpush1.xpose.msra.mxu0 0.0
        %228 = vmatprep.subr.mxu0 0.0
        %229 = vmatpush1.xpose.msra.mxu0 0.0
        %230 = vmatprep.subr.mxu0 0.0
        %231 = vmatpush1.xpose.msra.mxu0 0.0
        %232 = vmatprep.subr.mxu0 0.0
        %233 = vmatpush1.xpose.msra.mxu0 0.0
        %234 = vmatprep.subr.mxu0 0.0
        %235 = vmatpush1.xpose.msra.mxu0 0.0
        %236 = vmatprep.subr.mxu0 0.0
        %237 = vmatpush1.xpose.msra.mxu0 0.0
        %238 = vmatprep.subr.mxu0 0.0
        %239 = vmatpush1.xpose.msra.mxu0 0.0
        %240 = vmatprep.subr.mxu0 0.0
        %241 = vmatpush1.xpose.msra.mxu0 0.0
        %242 = vmatprep.subr.mxu0 0.0
        %243 = vmatpush1.xpose.msra.mxu0 0.0
        %244 = vmatprep.subr.mxu0 0.0
        %245 = vmatpush1.xpose.msra.mxu0 0.0
        %246 = vmatprep.subr.mxu0 0.0
        %247 = vmatpush1.xpose.msra.mxu0 0.0
        %248 = vmatprep.subr.mxu0 0.0
        %249 = vmatpush1.xpose.msra.mxu0 0.0
        %250 = vmatprep.subr.mxu0 0.0
        %251 = vmatpush1.xpose.msra.mxu0 0.0
        %252 = vmatprep.subr.mxu0 %v220
        %253 = vmatpush1.xpose.msra.mxu0 %v217
        %254 = vmatprep.subr.mxu0 0.0
        %255 = vmatpush2.xpose.msra.mxu0 0.0
        %256 = vmatprep.subr.mxu0 0.0
        %257 = vmatpush2.xpose.msra.mxu0 0.0
        %258 = vmatprep.subr.mxu0 0.0
        %259 = vmatpush2.xpose.msra.mxu0 0.0
        %260 = vmatprep.subr.mxu0 0.0
        %261 = vmatpush2.xpose.msra.mxu0 0.0
        %262 = vmatprep.subr.mxu0 0.0
        %263 = vmatpush2.xpose.msra.mxu0 0.0
        %264 = vmatprep.subr.mxu0 0.0
        %265 = vmatpush2.xpose.msra.mxu0 0.0
        %266 = vmatprep.subr.mxu0 0.0
        %267 = vmatpush2.xpose.msra.mxu0 0.0
        %268 = vmatprep.subr.mxu0 0.0
        %269 = vmatpush2.xpose.msra.mxu0 0.0
        %270 = vmatprep.subr.mxu0 0.0
        %271 = vmatpush2.xpose.msra.mxu0 0.0
        %272 = vmatprep.subr.mxu0 0.0
        %273 = vmatpush2.xpose.msra.mxu0 0.0
        %274 = vmatprep.subr.mxu0 0.0
        %275 = vmatpush2.xpose.msra.mxu0 0.0
        %276 = vmatprep.subr.mxu0 0.0
        %277 = vmatpush2.xpose.msra.mxu0 0.0
        %278 = vmatprep.subr.mxu0 0.0
        %279 = vmatpush2.xpose.msra.mxu0 0.0
        %280 = vmatprep.subr.mxu0 0.0
        %281 = vmatpush2.xpose.msra.mxu0 0.0
        %282 = vmatprep.subr.mxu0 0.0
        %283 = vmatpush2.xpose.msra.mxu0 0.0
        %284 = vmatprep.subr.mxu0 0.0
        %285 = vmatpush2.xpose.msra.mxu0 0.0
        %286 = vmatprep.mubr.f32.mxu0 %v220
        %287 = vmatmul.mubr.f32.gmra.mxu0 %v217
        %v288 = vpop.f32.mrf.mxu0
        %v289 = vadd.f32 0.0, %v288
        %v290 = vpop.f32.mrf.mxu0
        %291 = vdwg.mxu0
        %v292 = vadd.f32 %v218, %v289
        %vm293 = vcmask 27648
        %294 = vst.msk [vmem:[%s190] sm:$0xf] %vm293, %v292
        %v295 = vld [vmem:[%s208] sm:$0xf]
        %vm296 = vcmask 1043456
        %v297 = vsel %vm296, %v217, 0.0
        %v298 = vsel %vm296, %v220, 0.0
        %v299 = vadd.f32 %v297, %v298
        %300 = vadd.xlane.f32.xlu0 %v299
        %v301 = vpop.xlane.xlu0 %300
        %v302 = vadd.f32 %v295, %v301
        %vm303 = vcmask 3072
        %304 = vst.msk [vmem:[%s208] sm:$0xf] %vm303, %v302
        %s305 = sand.u32 %s79, 1
        %s306 = scalar_lea.sflag [#allocation4], %s305
        %s307 = sand.u32 %s79, 1
        %s308 = smul.addr %s307, 4
        %s309 = scalar_lea.vmem [#allocation5], %s308
        %p310 = scmp.lt.s32.totalorder %s26, 1
        %s311 = scalar_select %p310, %s26, 1
        %p312 = scmp.lt.s32.totalorder %s25, 0
        %s313 = scalar_select %p312, %s25, 0
        %s314 = sadd.s32 %s313, %s311
        %s315 = smul.addr %s314, 4
        %s316 = scalar_lea.vmem %s2, %s315
        // Predicated region
        $region33: #{tpu_custom_call.1} parent=23 // pred_check
          %p317 = pneg %p89
        $region34: #{tpu_custom_call.1} parent=23 // pred_check_branch
          %319 = sbr.rel (%p317) target = $region36
        $region35: #{tpu_custom_call.1} parent=23 // pred_region
          %s321 = ssub.s32 64, 64
          %322 = vsyncadd %s306, %s321
          %s323 = sadd.s32 %s25, %s26
          %s324 = smul.addr %s323, 64
          %s325 = scalar_lea.hbm %s1, %s324
          %s327 = sshll.u32 %s309, 4
          %s328 = int_to_ptr.vmem [resolvable:$true] %s327
          %330 = dma.vmem_to_hbm [thread:$0]  %s328, 64, %s325, %s306
        $region36: #{tpu_custom_call.1} parent=23 // pred_fallthru
          _
        // Predicated region
        $region37: #{tpu_custom_call.1} parent=23 // pred_check
          %p331 = pneg %p117
        $region38: #{tpu_custom_call.1} parent=23 // pred_check_branch
          %333 = sbr.rel (%p331) target = $region40
        $region39: #{tpu_custom_call.1} parent=23 // pred_region
          _
        $region40: #{tpu_custom_call.1} parent=23 // pred_fallthru
          _
      $region24: #{tpu_custom_call.1} parent=5 // pred_fallthru
        _
      %p334 = scmp.le.s32.totalorder 2, %s15
      // Predicated region
      $region41: #{tpu_custom_call.1} parent=5 // pred_check
        %p335 = pneg %p334
      $region42: #{tpu_custom_call.1} parent=5 // pred_check_branch
        %337 = sbr.rel (%p335) target = $region44
      $region43: #{tpu_custom_call.1} parent=5 // pred_region
        %s338 = ssub.s32 %s15, 2
        // Predicated region
        $region45: #{tpu_custom_call.1} parent=43 // pred_check
          %p339 = pneg %p95
        $region46: #{tpu_custom_call.1} parent=43 // pred_check_branch
          %341 = sbr.rel (%p339) target = $region48
        $region47: #{tpu_custom_call.1} parent=43 // pred_region
          %s342 = sand.u32 %s80, 1
          %s343 = scalar_lea.sflag [#allocation4], %s342
          %s344 = sand.u32 %s80, 1
          %s345 = smul.addr %s344, 4
          %s346 = scalar_lea.vmem [#allocation5], %s345
          %347 = dma.done %s343, 64
        $region48: #{tpu_custom_call.1} parent=43 // pred_fallthru
          _
        // Predicated region
        $region49: #{tpu_custom_call.1} parent=43 // pred_check
          %p348 = pneg %p123
        $region50: #{tpu_custom_call.1} parent=43 // pred_check_branch
          %350 = sbr.rel (%p348) target = $region52
        $region51: #{tpu_custom_call.1} parent=43 // pred_region
          %p351 = scmp.lt.s32.totalorder %s29, 1
          %s352 = scalar_select %p351, %s29, 1
          %p353 = scmp.lt.s32.totalorder %s28, 0
          %s354 = scalar_select %p353, %s28, 0
          %s355 = sadd.s32 %s354, %s352
          %s356 = smul.addr %s355, 4
          %s357 = scalar_lea.vmem %s2, %s356
        $region52: #{tpu_custom_call.1} parent=43 // pred_fallthru
          _
      $region44: #{tpu_custom_call.1} parent=5 // pred_fallthru
        _
    $region6: #{tpu_custom_call.1} parent=1 // loop_footer
      %s19 = sadd.s32 1, %s15
    $region7: #{tpu_custom_call.1} parent=1 // loop_footer_branch
      %14 = sbr.rel target = $region3
    $region8: #{tpu_custom_call.1} parent=1 // loop_exit
      _
    %358 = vsyncpa [#allocation3], 1
    %s359 = scalar_lea.sflag [#allocation3], 1
    %360 = vsyncpa %s359, 1
    %361 = vsyncpa [#allocation4], 1
    %s362 = scalar_lea.sflag [#allocation4], 1
    %363 = vsyncpa %s362, 1

</llo_original>
